<compile_context>
chip_gen: v7x
topology: tpu7x:2x2x1
jax: 0.10.0
libtpu: 0.0.40
codegen_flags: <defaults>
</compile_context>

<pallas_src>
import jax
import jax.numpy as jnp
from jax.experimental import pallas as pl
from jax.experimental.pallas import tpu as pltpu

_HIDDEN = 50
_OUT = 6
_OUT_PAD = 8        # class rows padded to a sublane multiple
_LANE = 128


def _net_kernel(x_ref, w1_ref, b1_ref, w2_ref, b2_ref, o_ref):
    # x: (1, tb), w1: (50, 1), b1: (50, 1), w2: (8, 50), b2: (8, 1),
    # o: (8, tb).  All float32.  Batch is the lane axis everywhere.
    x = x_ref[...]

    # fc1 + ReLU.  K == 1 -> outer product; keep it on the VPU as a broadcast
    # multiply-add instead of paying an MXU push/pop.
    h = jnp.maximum(w1_ref[...] * x + b1_ref[...], 0.0)              # (50, tb)

    # fc2 on the MXU with batch as the lane-dense N axis.  Padded class rows
    # 6..7 have zero weights and -inf bias, so softmax assigns them exactly 0.
    logits = jnp.dot(w2_ref[...], h, preferred_element_type=jnp.float32)
    logits = logits + b2_ref[...]                                     # (8, tb)

    # Numerically-stable softmax over the class (sublane) axis == PyTorch
    # dim=1.  Exact divide so each column sums to 1 to fp32 rounding.
    m = jnp.max(logits, axis=0, keepdims=True)                        # (1, tb)
    e = jnp.exp(logits - m)                                           # (8, tb)
    denom = jnp.sum(e, axis=0, keepdims=True)                         # (1, tb)
    o_ref[...] = (e / denom).astype(o_ref.dtype)


def prepare_params(w1, b1, w2, b2):
    """One-time layout prep (hoisted out of the per-call path).

    w1: (1, 50), b1: (1, 50) or (50,), w2: (50, 6), b2: (1, 6) or (6,).
    Returns column / transposed, class-padded fp32 params for the kernel.
    """
    w1c = jnp.reshape(w1, (_HIDDEN, 1)).astype(jnp.float32)
    b1c = jnp.reshape(b1, (_HIDDEN, 1)).astype(jnp.float32)
    w2t = jnp.zeros((_OUT_PAD, _HIDDEN), jnp.float32).at[:_OUT, :].set(
        jnp.transpose(w2).astype(jnp.float32))
    b2t = jnp.full((_OUT_PAD, 1), -jnp.inf, jnp.float32).at[:_OUT, :].set(
        jnp.reshape(b2, (_OUT, 1)).astype(jnp.float32))
    return w1c, b1c, w2t, b2t


def _pick_batch_tile(batch, batch_tile):
    """Lane-aligned batch tile; keep >= 2 grid steps when batch is big enough
    so v7x's two TensorCores can both get work via the 'parallel' axis."""
    b128 = ((max(batch, 1) + _LANE - 1) // _LANE) * _LANE
    tb = min(((batch_tile + _LANE - 1) // _LANE) * _LANE, b128)
    if b128 >= 2 * _LANE:
        half = ((pl.cdiv(b128, 2) + _LANE - 1) // _LANE) * _LANE
        tb = min(tb, half)
    return max(tb, _LANE)


def net_forward(x, params, *, batch_tile=32768):
    """softmax(relu(x @ W1 + b1) @ W2 + b2, axis=1); x: (B, 1) -> (B, 6)."""
    w1c, b1c, w2t, b2t = params
    B = x.shape[0]
    tb = _pick_batch_tile(B, batch_tile)
    Bp = ((B + tb - 1) // tb) * tb

    # Batch on the lane axis; padded columns are sliced off at the end.
    xr = jnp.reshape(x.astype(jnp.float32), (1, B))
    if Bp != B:
        xr = jnp.pad(xr, ((0, 0), (0, Bp - B)))

    out = pl.pallas_call(
        _net_kernel,
        out_shape=jax.ShapeDtypeStruct((_OUT_PAD, Bp), jnp.float32),
        grid=(Bp // tb,),
        in_specs=[
            pl.BlockSpec((1, tb), lambda i: (0, i)),               # x tile
            pl.BlockSpec((_HIDDEN, 1), lambda i: (0, 0)),          # w1 column
            pl.BlockSpec((_HIDDEN, 1), lambda i: (0, 0)),          # b1 column
            pl.BlockSpec((_OUT_PAD, _HIDDEN), lambda i: (0, 0)),   # w2^T padded
            pl.BlockSpec((_OUT_PAD, 1), lambda i: (0, 0)),         # b2^T padded
        ],
        out_specs=pl.BlockSpec((_OUT_PAD, tb), lambda i: (0, i)),
        compiler_params=pltpu.CompilerParams(
            dimension_semantics=("parallel",),     # 2-TC sharding on v7x
            vmem_limit_bytes=32 * 1024 * 1024),    # large-tb headroom on v5e
    )(xr, w1c, b1c, w2t, b2t)

    return jnp.transpose(out[:_OUT, :B])           # (B, 6)


def init_params(key):
    """PyTorch-default Linear init: uniform(-1/sqrt(fan_in), 1/sqrt(fan_in))."""
    k1, k2, k3, k4 = jax.random.split(key, 4)
    bound1 = 1.0
    w1 = jax.random.uniform(k1, (1, _HIDDEN), jnp.float32, -bound1, bound1)
    b1 = jax.random.uniform(k2, (1, _HIDDEN), jnp.float32, -bound1, bound1)
    bound2 = 1.0 / jnp.sqrt(float(_HIDDEN))
    w2 = jax.random.uniform(k3, (_HIDDEN, _OUT), jnp.float32, -bound2, bound2)
    b2 = jax.random.uniform(k4, (1, _OUT), jnp.float32, -bound2, bound2)
    return w1, b1, w2, b2


if __name__ == "__main__":
    key = jax.random.PRNGKey(0)
    kx_small, kx_big, kp = jax.random.split(key, 3)
    w1, b1, w2, b2 = init_params(kp)
    params = prepare_params(w1, b1, w2, b2)

    def ref_forward(xb):
        h = jnp.maximum(xb @ w1 + b1, 0.0)
        return jax.nn.softmax(h @ w2 + b2, axis=1)

    cases = (
        ("small", jax.random.normal(kx_small, (8, 1), jnp.float32)),    # 1 tile
        ("tiled", jax.random.normal(kx_big, (1000, 1), jnp.float32)),   # 2 tiles + tail pad
    )
    for name, xb in cases:
        out = jax.block_until_ready(net_forward(xb, params))
        ref = ref_forward(xb)
        assert out.shape == (xb.shape[0], _OUT), name
        assert jnp.allclose(out, ref, atol=1e-4, rtol=1e-4), name
        assert jnp.allclose(jnp.sum(out, axis=1), 1.0, atol=1e-4), name

    print("KERNEL_OK")
</pallas_src>

<mosaic_0001>
module attributes {stable_mosaic.version = 11 : i64} {
  func.func @_net_kernel(%arg0: i32, %arg1: memref<1x128xf32, #tpu.memory_space<vmem>>, %arg2: memref<50x1xf32, #tpu.memory_space<vmem>>, %arg3: memref<50x1xf32, #tpu.memory_space<vmem>>, %arg4: memref<8x50xf32, #tpu.memory_space<vmem>>, %arg5: memref<8x1xf32, #tpu.memory_space<vmem>>, %arg6: memref<8x128xf32, #tpu.memory_space<vmem>>) attributes {dimension_semantics = [#tpu.dimension_semantics<parallel>], iteration_bounds = array<i64: 1>, scalar_prefetch = 0 : i64, scratch_operands = 0 : i64, tpu.core_type = #tpu.core_type<tc>, window_params = [{transform_indices = @transform_0, window_bounds = array<i64: 1, 128>}, {pipeline_mode = #tpu.pipeline_mode<synchronous>, transform_indices = @transform_1, window_bounds = array<i64: 50, 1>}, {pipeline_mode = #tpu.pipeline_mode<synchronous>, transform_indices = @transform_2, window_bounds = array<i64: 50, 1>}, {pipeline_mode = #tpu.pipeline_mode<synchronous>, transform_indices = @transform_3, window_bounds = array<i64: 8, 50>}, {pipeline_mode = #tpu.pipeline_mode<synchronous>, transform_indices = @transform_4, window_bounds = array<i64: 8, 1>}, {transform_indices = @transform_5, window_bounds = array<i64: 8, 128>}]} {
    %c0 = arith.constant 0 : index
    %c0_0 = arith.constant 0 : index
    %0 = vector.load %arg1[%c0, %c0_0] : memref<1x128xf32, #tpu.memory_space<vmem>>, vector<1x128xf32>
    %c0_1 = arith.constant 0 : index
    %c0_2 = arith.constant 0 : index
    %1 = vector.load %arg2[%c0_1, %c0_2] : memref<50x1xf32, #tpu.memory_space<vmem>>, vector<50x1xf32>
    %2 = vector.broadcast %1 : vector<50x1xf32> to vector<50x128xf32>
    %3 = vector.broadcast %0 : vector<1x128xf32> to vector<50x128xf32>
    %4 = arith.mulf %2, %3 : vector<50x128xf32>
    %c0_3 = arith.constant 0 : index
    %c0_4 = arith.constant 0 : index
    %5 = vector.load %arg3[%c0_3, %c0_4] : memref<50x1xf32, #tpu.memory_space<vmem>>, vector<50x1xf32>
    %6 = vector.broadcast %5 : vector<50x1xf32> to vector<50x128xf32>
    %7 = arith.addf %4, %6 : vector<50x128xf32>
    %cst = arith.constant 0.000000e+00 : f32
    %8 = vector.broadcast %cst : f32 to vector<50x128xf32>
    %9 = arith.maximumf %7, %8 : vector<50x128xf32>
    %c0_5 = arith.constant 0 : index
    %c0_6 = arith.constant 0 : index
    %10 = vector.load %arg4[%c0_5, %c0_6] : memref<8x50xf32, #tpu.memory_space<vmem>>, vector<8x50xf32>
    %cst_7 = arith.constant dense<0.000000e+00> : vector<8x128xf32>
    %11 = tpu.matmul %10, %9, %cst_7 {dimension_numbers = #tpu.dot_dimension_numbers<[1], [0], [0], [1], [0, 0, 1, 1], [], []>} : vector<8x50xf32>, vector<50x128xf32>, vector<8x128xf32> -> vector<8x128xf32>
    %c0_8 = arith.constant 0 : index
    %c0_9 = arith.constant 0 : index
    %12 = vector.load %arg5[%c0_8, %c0_9] : memref<8x1xf32, #tpu.memory_space<vmem>>, vector<8x1xf32>
    %13 = vector.broadcast %12 : vector<8x1xf32> to vector<8x128xf32>
    %14 = arith.addf %11, %13 : vector<8x128xf32>
    %cst_10 = arith.constant dense<0xFF800000> : vector<128xf32>
    %15 = vector.multi_reduction <maximumf>, %14, %cst_10 [0] : vector<8x128xf32> to vector<128xf32>
    %16 = vector.shape_cast %15 : vector<128xf32> to vector<1x128xf32>
    %17 = vector.broadcast %16 : vector<1x128xf32> to vector<8x128xf32>
    %18 = arith.subf %14, %17 : vector<8x128xf32>
    %19 = math.exp %18 : vector<8x128xf32>
    %cst_11 = arith.constant dense<0.000000e+00> : vector<128xf32>
    %20 = vector.multi_reduction <add>, %19, %cst_11 [0] : vector<8x128xf32> to vector<128xf32>
    %21 = vector.shape_cast %20 : vector<128xf32> to vector<1x128xf32>
    %22 = vector.broadcast %21 : vector<1x128xf32> to vector<8x128xf32>
    %23 = arith.divf %19, %22 : vector<8x128xf32>
    %c0_12 = arith.constant 0 : index
    %c0_13 = arith.constant 0 : index
    %24 = vector.load %arg6[%c0_12, %c0_13] : memref<8x128xf32, #tpu.memory_space<vmem>>, vector<8x128xf32>
    tpu.vector_store %arg6[%c0_12, %c0_13], %23 {strides = array<i32>} : memref<8x128xf32, #tpu.memory_space<vmem>>, vector<8x128xf32>,
    return
  }
  func.func @transform_0(%arg0: i32) -> (i32, i32) {
    %c0_i32 = arith.constant 0 : i32
    %c0_i32_0 = arith.constant 0 : i32
    return %c0_i32, %arg0 : i32, i32
  }
  func.func @transform_1(%arg0: i32) -> (i32, i32) {
    %c0_i32 = arith.constant 0 : i32
    %c0_i32_0 = arith.constant 0 : i32
    %c0_i32_1 = arith.constant 0 : i32
    return %c0_i32, %c0_i32_0 : i32, i32
  }
  func.func @transform_2(%arg0: i32) -> (i32, i32) {
    %c0_i32 = arith.constant 0 : i32
    %c0_i32_0 = arith.constant 0 : i32
    %c0_i32_1 = arith.constant 0 : i32
    return %c0_i32, %c0_i32_0 : i32, i32
  }
  func.func @transform_3(%arg0: i32) -> (i32, i32) {
    %c0_i32 = arith.constant 0 : i32
    %c0_i32_0 = arith.constant 0 : i32
    %c0_i32_1 = arith.constant 0 : i32
    return %c0_i32, %c0_i32_0 : i32, i32
  }
  func.func @transform_4(%arg0: i32) -> (i32, i32) {
    %c0_i32 = arith.constant 0 : i32
    %c0_i32_0 = arith.constant 0 : i32
    %c0_i32_1 = arith.constant 0 : i32
    return %c0_i32, %c0_i32_0 : i32, i32
  }
  func.func @transform_5(%arg0: i32) -> (i32, i32) {
    %c0_i32 = arith.constant 0 : i32
    %c0_i32_0 = arith.constant 0 : i32
    return %c0_i32, %arg0 : i32, i32
  }
}

</mosaic_0001>

<llo_original>
// kernel: tpu_custom_call.1
$region0: #{tpu_custom_call.1}
  #allocation0 [shape = 'u32[]', space=smem, size = 0x4, offset = 0x4, fixed_abs, tag = 'smem constant byte address 0x4 - core index']
  #allocation1 [shape = 'u32[144,128]{1,0:T(1,128)}', space=vmem, size = 0x12000, scoped, tag = 'internal scratch']
  %s0 = inlined_call_operand.vmem [shape: f32[1,128], index: 0, kind: input, shape index: {}]
  %s1 = inlined_call_operand.vmem [shape: f32[50,1], index: 1, kind: input, shape index: {}]
  %s2 = inlined_call_operand.vmem [shape: f32[50,1], index: 2, kind: input, shape index: {}]
  %s3 = inlined_call_operand.vmem [shape: f32[8,50], index: 3, kind: input, shape index: {}]
  %s4 = inlined_call_operand.vmem [shape: f32[8,1], index: 4, kind: input, shape index: {}]
  %s5 = inlined_call_operand.hbm [shape: f32[8,128], index: 5, kind: output, shape index: {}]
  %s6 = sld [smem:[#allocation0]]
  $region30: #{tpu_custom_call.1} parent=0
    _
  %s8 = ssub.s32 1, %s6
  %s9 = scalar_select 0, %s8, %s6
  $region1: #{tpu_custom_call.1} parent=0
    #allocation2 [shape = 'u8[4096]{0}', space=vmem, size = 0x1000, scoped, tag = 'output window, operand 0, single buffered']
    #allocation3 [shape = 's32[1]{0}', space=sflag, size = 0x4, scoped, tag = 'scoped memory for tpu_custom_call.1']
    %10 = vsyncpa [#allocation3], 0
    // Predicated region
    $region2: #{tpu_custom_call.1} parent=1 // pred_check
      _
    $region3: #{tpu_custom_call.1} parent=1 // pred_check_branch
      %12 = sbr.rel (0) target = $region5
    $region4: #{tpu_custom_call.1} parent=1 // pred_region
      _
    $region5: #{tpu_custom_call.1} parent=1 // pred_fallthru
      _
    // Predicated region
    $region6: #{tpu_custom_call.1} parent=1 // pred_check
      _
    $region7: #{tpu_custom_call.1} parent=1 // pred_check_branch
      %14 = sbr.rel (0) target = $region9
    $region8: #{tpu_custom_call.1} parent=1 // pred_region
      _
    $region9: #{tpu_custom_call.1} parent=1 // pred_fallthru
      _
    // Predicated region
    $region10: #{tpu_custom_call.1} parent=1 // pred_check
      _
    $region11: #{tpu_custom_call.1} parent=1 // pred_check_branch
      %16 = sbr.rel (0) target = $region13
    $region12: #{tpu_custom_call.1} parent=1 // pred_region
      _
    $region13: #{tpu_custom_call.1} parent=1 // pred_fallthru
      _
    // Predicated region
    $region14: #{tpu_custom_call.1} parent=1 // pred_check
      _
    $region15: #{tpu_custom_call.1} parent=1 // pred_check_branch
      %18 = sbr.rel (0) target = $region17
    $region16: #{tpu_custom_call.1} parent=1 // pred_region
      _
    $region17: #{tpu_custom_call.1} parent=1 // pred_fallthru
      _
    // Predicated region
    $region18: #{tpu_custom_call.1} parent=1 // pred_check
      _
    $region19: #{tpu_custom_call.1} parent=1 // pred_check_branch
      %20 = sbr.rel (0) target = $region21
    $region20: #{tpu_custom_call.1} parent=1 // pred_region
      _
    $region21: #{tpu_custom_call.1} parent=1 // pred_fallthru
      _
    %v21 = vld [vmem:[%s0] sm:$0x1]
    %v22 = vld [vmem:[%s1] sm:$0xff]
    %v23 = vld [vmem:[%s1 + $0x8] sm:$0xff]
    %v24 = vld [vmem:[%s1 + $0x10] sm:$0xff]
    %v25 = vld [vmem:[%s1 + $0x18] sm:$0xff]
    %v26 = vld [vmem:[%s1 + $0x20] sm:$0xff]
    %v27 = vld [vmem:[%s1 + $0x28] sm:$0xff]
    %v28 = vld [vmem:[%s1 + $0x30] sm:$0x3]
    %30 = vset.pattern.permute.xlu0 0
    %31 = vperm.xlu0 %30, %v22
    %v32 = vpop.permute.xlu0 %31
    %35 = vset.pattern.permute.xlu0 0
    %36 = vperm.xlu0 %35, %v23
    %v37 = vpop.permute.xlu0 %36
    %40 = vset.pattern.permute.xlu0 0
    %41 = vperm.xlu0 %40, %v24
    %v42 = vpop.permute.xlu0 %41
    %45 = vset.pattern.permute.xlu0 0
    %46 = vperm.xlu0 %45, %v25
    %v47 = vpop.permute.xlu0 %46
    %50 = vset.pattern.permute.xlu0 0
    %51 = vperm.xlu0 %50, %v26
    %v52 = vpop.permute.xlu0 %51
    %55 = vset.pattern.permute.xlu0 0
    %56 = vperm.xlu0 %55, %v27
    %v57 = vpop.permute.xlu0 %56
    %60 = vset.pattern.permute.xlu0 0
    %61 = vperm.xlu0 %60, %v28
    %v62 = vpop.permute.xlu0 %61
    %v65 = vlaneseq
    %v66 = vshrl.u32 %v65, 7
    %v67 = vsub.s32 0, %v66
    %v68 = vrot.slane %v21, %v67
    %v70 = vmul.f32 %v32, %v68
    %v71 = vmul.f32 %v37, %v68
    %v72 = vmul.f32 %v42, %v68
    %v73 = vmul.f32 %v47, %v68
    %v74 = vmul.f32 %v52, %v68
    %v75 = vmul.f32 %v57, %v68
    %v76 = vmul.f32 %v62, %v68
    %v77 = vld [vmem:[%s2] sm:$0xff]
    %v78 = vld [vmem:[%s2 + $0x8] sm:$0xff]
    %v79 = vld [vmem:[%s2 + $0x10] sm:$0xff]
    %v80 = vld [vmem:[%s2 + $0x18] sm:$0xff]
    %v81 = vld [vmem:[%s2 + $0x20] sm:$0xff]
    %v82 = vld [vmem:[%s2 + $0x28] sm:$0xff]
    %v83 = vld [vmem:[%s2 + $0x30] sm:$0x3]
    %85 = vset.pattern.permute.xlu0 0
    %86 = vperm.xlu0 %85, %v77
    %v87 = vpop.permute.xlu0 %86
    %90 = vset.pattern.permute.xlu0 0
    %91 = vperm.xlu0 %90, %v78
    %v92 = vpop.permute.xlu0 %91
    %95 = vset.pattern.permute.xlu0 0
    %96 = vperm.xlu0 %95, %v79
    %v97 = vpop.permute.xlu0 %96
    %100 = vset.pattern.permute.xlu0 0
    %101 = vperm.xlu0 %100, %v80
    %v102 = vpop.permute.xlu0 %101
    %105 = vset.pattern.permute.xlu0 0
    %106 = vperm.xlu0 %105, %v81
    %v107 = vpop.permute.xlu0 %106
    %110 = vset.pattern.permute.xlu0 0
    %111 = vperm.xlu0 %110, %v82
    %v112 = vpop.permute.xlu0 %111
    %115 = vset.pattern.permute.xlu0 0
    %116 = vperm.xlu0 %115, %v83
    %v117 = vpop.permute.xlu0 %116
    %v119 = vadd.f32 %v70, %v87
    %v120 = vadd.f32 %v71, %v92
    %v121 = vadd.f32 %v72, %v97
    %v122 = vadd.f32 %v73, %v102
    %v123 = vadd.f32 %v74, %v107
    %v124 = vadd.f32 %v75, %v112
    %v125 = vadd.f32 %v76, %v117
    %v126 = vmax.f32 %v119, 0.0
    %v127 = vmax.f32 %v120, 0.0
    %v128 = vmax.f32 %v121, 0.0
    %v129 = vmax.f32 %v122, 0.0
    %v130 = vmax.f32 %v123, 0.0
    %v131 = vmax.f32 %v124, 0.0
    %v132 = vmax.f32 %v125, 0.0
    %v133 = vld [vmem:[%s3] sm:$0xff]
    %v134 = vld [vmem:[%s4] sm:$0xff]
    %136 = vset.pattern.permute.xlu0 0
    %137 = vperm.xlu0 %136, %v134
    %v138 = vpop.permute.xlu0 %137
    %vm140 = vcmask 408576
    %v142 = vsel %vm140, %v133, 0
    %vm144 = vcmask 1041408
    %v146 = vsel %vm144, %v132, 0
    %148 = vmatprep.subr.mxu0 0.0
    %149 = vmatpush1.msra.mxu0 %v126
    %150 = vmatprep.subr.mxu0 0.0
    %151 = vmatpush1.msra.mxu0 %v127
    %152 = vmatprep.subr.mxu0 0.0
    %153 = vmatpush1.msra.mxu0 %v128
    %154 = vmatprep.subr.mxu0 0.0
    %155 = vmatpush1.msra.mxu0 %v129
    %156 = vmatprep.subr.mxu0 0.0
    %157 = vmatpush1.msra.mxu0 %v130
    %158 = vmatprep.subr.mxu0 0.0
    %159 = vmatpush1.msra.mxu0 %v131
    %160 = vmatprep.subr.mxu0 0.0
    %161 = vmatpush1.msra.mxu0 %v146
    %162 = vmatprep.subr.mxu0 0.0
    %163 = vmatpush1.msra.mxu0 0.0
    %164 = vmatprep.subr.mxu0 0.0
    %165 = vmatpush1.msra.mxu0 0.0
    %166 = vmatprep.subr.mxu0 0.0
    %167 = vmatpush1.msra.mxu0 0.0
    %168 = vmatprep.subr.mxu0 0.0
    %169 = vmatpush1.msra.mxu0 0.0
    %170 = vmatprep.subr.mxu0 0.0
    %171 = vmatpush1.msra.mxu0 0.0
    %172 = vmatprep.subr.mxu0 0.0
    %173 = vmatpush1.msra.mxu0 0.0
    %174 = vmatprep.subr.mxu0 0.0
    %175 = vmatpush1.msra.mxu0 0.0
    %176 = vmatprep.subr.mxu0 0.0
    %177 = vmatpush1.msra.mxu0 0.0
    %178 = vmatprep.subr.mxu0 0.0
    %179 = vmatpush1.msra.mxu0 0.0
    %180 = vmatprep.subr.mxu0 0.0
    %181 = vmatpush1.msra.mxu0 0.0
    %182 = vmatprep.subr.mxu0 0.0
    %183 = vmatpush1.msra.mxu0 0.0
    %184 = vmatprep.subr.mxu0 0.0
    %185 = vmatpush1.msra.mxu0 0.0
    %186 = vmatprep.subr.mxu0 0.0
    %187 = vmatpush1.msra.mxu0 0.0
    %188 = vmatprep.subr.mxu0 0.0
    %189 = vmatpush1.msra.mxu0 0.0
    %190 = vmatprep.subr.mxu0 0.0
    %191 = vmatpush1.msra.mxu0 0.0
    %192 = vmatprep.subr.mxu0 0.0
    %193 = vmatpush1.msra.mxu0 0.0
    %194 = vmatprep.subr.mxu0 0.0
    %195 = vmatpush1.msra.mxu0 0.0
    %196 = vmatprep.subr.mxu0 0.0
    %197 = vmatpush1.msra.mxu0 0.0
    %198 = vmatprep.subr.mxu0 0.0
    %199 = vmatpush1.msra.mxu0 0.0
    %200 = vmatprep.subr.mxu0 0.0
    %201 = vmatpush1.msra.mxu0 0.0
    %202 = vmatprep.subr.mxu0 0.0
    %203 = vmatpush1.msra.mxu0 0.0
    %204 = vmatprep.subr.mxu0 0.0
    %205 = vmatpush1.msra.mxu0 0.0
    %206 = vmatprep.subr.mxu0 0.0
    %207 = vmatpush1.msra.mxu0 0.0
    %208 = vmatprep.subr.mxu0 0.0
    %209 = vmatpush1.msra.mxu0 0.0
    %210 = vmatprep.subr.mxu0 0.0
    %211 = vmatpush1.msra.mxu0 0.0
    %212 = vmatprep.mubr.f32.mxu0 0.0
    %213 = vmatmul.mubr.f32.gmra.mrb[0].mxu0 %v142
    %v214 = vpop.f32.mrb[0].mxu0
    %v215 = vadd.f32 %v138, %v214
    %v216 = vpop.f32.mrb[0].mxu0
    %217 = vdwg.mxu0
    %v218 = vrot.slane %v215, 4
    %v219 = vmax.f32 %v215, %v218
    %v220 = vrot.slane %v219, 2
    %v221 = vmax.f32 %v219, %v220
    %v222 = vrot.slane %v221, 1
    %v223 = vmax.f32 %v221, %v222
    %v224 = vsub.f32 %v215, %v223
    %v225 = vmul.f32 %v224, 1.442695
    %v226 = vpow.pop %v225
    %v227 = vrot.slane %v226, 4
    %v228 = vadd.f32 %v226, %v227
    %v229 = vrot.slane %v228, 2
    %v230 = vadd.f32 %v228, %v229
    %v231 = vrot.slane %v230, 1
    %v232 = vadd.f32 %v230, %v231
    %v233 = vrcp.pop %v232
    %v234 = vmul.f32 %v226, %v233
    %235 = vst [vmem:[#allocation2] sm:$0xff] %v234
    // Predicated region
    $region22: #{tpu_custom_call.1} parent=1 // pred_check
      _
    $region23: #{tpu_custom_call.1} parent=1 // pred_check_branch
      %237 = sbr.rel (0) target = $region25
    $region24: #{tpu_custom_call.1} parent=1 // pred_region
      %s239 = ssub.s32 128, 128
      %240 = vsyncadd [#allocation3], %s239
      %s242 = sshll.u32 [#allocation2], 4
      %s243 = int_to_ptr.vmem [resolvable:$true] %s242
      %245 = dma.vmem_to_hbm [thread:$0]  %s243, 128, %s5, [#allocation3]
    $region25: #{tpu_custom_call.1} parent=1 // pred_fallthru
      _
    // Predicated region
    $region26: #{tpu_custom_call.1} parent=1 // pred_check
      _
    $region27: #{tpu_custom_call.1} parent=1 // pred_check_branch
      %247 = sbr.rel (0) target = $region29
    $region28: #{tpu_custom_call.1} parent=1 // pred_region
      %248 = dma.done [#allocation3], 128
    $region29: #{tpu_custom_call.1} parent=1 // pred_fallthru
      _
    %249 = vsyncpa [#allocation3], 1

</llo_original>
